<compile_context>
chip_gen: v7x
topology: tpu7x:2x2x1
jax: 0.10.0
libtpu: 0.0.40
codegen_flags: <defaults>
</compile_context>

<pallas_src>
import jax
import jax.numpy as jnp
from jax.experimental import pallas as pl
from jax.experimental.pallas import tpu as pltpu


def res_mlp_kernel(alpha_ref, x_ref, w1_ref, b1_ref, w2_ref, b2_ref, o_ref):
    # alpha_ref: SMEM (2,) f32 -> [hidden PReLU alpha, output PReLU alpha]
    x_nat = x_ref[...]                                   # native dtype feeds the MXU
    x_f32 = x_nat.astype(jnp.float32)                    # residual path in f32

    # Linear(C -> 2C): MXU matmul with f32 accumulation.
    h = jnp.dot(x_nat, w1_ref[...], preferred_element_type=jnp.float32)
    h = h + b1_ref[...].astype(jnp.float32)
    a1 = alpha_ref[0]
    h = jnp.where(h >= 0, h, a1 * h)                     # hidden PReLU (single shared alpha)

    # Linear(2C -> C)
    h_in = h.astype(w2_ref.dtype)                        # bf16 weights -> native bf16 MXU path
    y = jnp.dot(h_in, w2_ref[...], preferred_element_type=jnp.float32)
    y = y + b2_ref[...].astype(jnp.float32)

    # residual add + output PReLU
    z = y + x_f32
    a2 = alpha_ref[1]
    o_ref[...] = jnp.where(z >= 0, z, a2 * z).astype(o_ref.dtype)


def _round_up(n, m):
    return ((n + m - 1) // m) * m


def res_mlp(x, w1, b1, w2, b2, alpha, *, tm=256):
    """x: (B, C); w1: (C, 2C); b1: (2C,); w2: (2C, C); b2: (C,); alpha: (2,) f32."""
    B, C = x.shape
    H = w1.shape[1]

    # Lane-dense padding: feature dims to multiples of 128. Zero padding is exact:
    # padded columns/rows contribute zeros through both matmuls, the residual and PReLU.
    Cp = _round_up(C, 128)
    Hp = _round_up(H, 128)
    x_p = jnp.pad(x, ((0, 0), (0, Cp - C))) if Cp != C else x
    w1_p = jnp.pad(w1, ((0, Cp - C), (0, Hp - H)))
    b1_p = jnp.pad(b1, ((0, Hp - H),)).reshape(1, Hp)
    w2_p = jnp.pad(w2, ((0, Hp - H), (0, Cp - C)))
    b2_p = jnp.pad(b2, ((0, Cp - C),)).reshape(1, Cp)

    # Row tile: large & 128-aligned fills the MXU; a small batch uses one full-extent block.
    if B < tm:
        tm = B
    grid = (pl.cdiv(B, tm),)

    # VMEM budget: resident weights + double-buffered x/out tiles + f32 intermediates,
    # clamped to the 64 MiB v7x physical budget.
    itemsize = jnp.dtype(x.dtype).itemsize
    w_itemsize = jnp.dtype(w1.dtype).itemsize
    b_itemsize = jnp.dtype(b1.dtype).itemsize
    weight_bytes = 2 * ((Cp * Hp + Hp * Cp) * w_itemsize + (Hp + Cp) * b_itemsize)
    io_bytes = 2 * 2 * tm * Cp * itemsize                    # x/out double buffers
    act_bytes = tm * Hp * 4 + 2 * tm * Cp * 4                # f32 intermediates
    vmem_limit = int(min(max(2 * (weight_bytes + io_bytes + act_bytes), 32 << 20), 64 << 20))

    cost = pl.CostEstimate(
        flops=int(4 * B * Cp * Hp),                          # two matmuls, 2*M*K*N each
        transcendentals=0,
        bytes_accessed=int(
            x_p.size * itemsize
            + (w1_p.size + w2_p.size) * w_itemsize
            + (b1_p.size + b2_p.size) * b_itemsize
            + B * Cp * itemsize
        ),
    )

    # TODO(synk): for very large C (>~1024 with f32 weights) add a K-reduction grid axis with a
    # VMEM f32 accumulator instead of holding the full (Cp,Hp)/(Hp,Cp) weights resident.
    out = pl.pallas_call(
        res_mlp_kernel,
        out_shape=jax.ShapeDtypeStruct((B, Cp), x.dtype),
        grid_spec=pltpu.PrefetchScalarGridSpec(
            num_scalar_prefetch=0,
            grid=grid,
            in_specs=[
                pl.BlockSpec(memory_space=pltpu.MemorySpace.SMEM),   # alpha (2,)
                pl.BlockSpec((tm, Cp), lambda i: (i, 0)),            # x row tile
                pl.BlockSpec((Cp, Hp), lambda i: (0, 0)),            # W1 (grid-invariant)
                pl.BlockSpec((1, Hp), lambda i: (0, 0)),             # b1
                pl.BlockSpec((Hp, Cp), lambda i: (0, 0)),            # W2 (grid-invariant)
                pl.BlockSpec((1, Cp), lambda i: (0, 0)),             # b2
            ],
            out_specs=pl.BlockSpec((tm, Cp), lambda i: (i, 0)),
        ),
        compiler_params=pltpu.CompilerParams(
            dimension_semantics=("parallel",),                       # row tiles are independent
            vmem_limit_bytes=vmem_limit,
        ),
        cost_estimate=cost,
    )(alpha, x_p, w1_p, b1_p, w2_p, b2_p)

    return out[:, :C] if Cp != C else out


def res_mlp_ref(x, w1, b1, w2, b2, alpha):
    xf = x.astype(jnp.float32)
    h = xf @ w1.astype(jnp.float32) + b1.astype(jnp.float32)
    h = jnp.where(h >= 0, h, alpha[0] * h)
    y = h @ w2.astype(jnp.float32) + b2.astype(jnp.float32)
    z = y + xf
    return jnp.where(z >= 0, z, alpha[1] * z).astype(x.dtype)


if __name__ == "__main__":
    B = 8            # rows (batch of feature vectors)
    C = 32           # in_channels
    H = 2 * C        # hidden width of the MLP

    key = jax.random.PRNGKey(0)
    kx, kw1, kb1, kw2, kb2 = jax.random.split(key, 5)

    x = jax.random.normal(kx, (B, C), dtype=jnp.float32)

    # Deterministic parameter init (PyTorch Linear-style uniform bounds), pre-transposed
    # to (in_features, out_features) for the kernel.
    lim1 = 1.0 / (C ** 0.5)
    w1 = jax.random.uniform(kw1, (C, H), minval=-lim1, maxval=lim1, dtype=jnp.float32)
    b1 = jax.random.uniform(kb1, (H,), minval=-lim1, maxval=lim1, dtype=jnp.float32)
    lim2 = 1.0 / (H ** 0.5)
    w2 = jax.random.uniform(kw2, (H, C), minval=-lim2, maxval=lim2, dtype=jnp.float32)
    b2 = jax.random.uniform(kb2, (C,), minval=-lim2, maxval=lim2, dtype=jnp.float32)

    # PReLU default init = 0.25 for both the hidden PReLU and the output activation.
    alpha = jnp.array([0.25, 0.25], dtype=jnp.float32)

    out = res_mlp(x, w1, b1, w2, b2, alpha)
    out = jax.block_until_ready(out)

    ref = res_mlp_ref(x, w1, b1, w2, b2, alpha)
    assert out.shape == (B, C)
    assert jnp.allclose(out, ref, atol=1e-5, rtol=1e-5)

    print("KERNEL_OK")
</pallas_src>

<mosaic_0001>
module attributes {stable_mosaic.version = 11 : i64} {
  func.func @res_mlp_kernel(%arg0: i32, %arg1: memref<2xf32, #tpu.memory_space<smem>>, %arg2: memref<8x128xf32, #tpu.memory_space<vmem>>, %arg3: memref<128x128xf32, #tpu.memory_space<vmem>>, %arg4: memref<1x128xf32, #tpu.memory_space<vmem>>, %arg5: memref<128x128xf32, #tpu.memory_space<vmem>>, %arg6: memref<1x128xf32, #tpu.memory_space<vmem>>, %arg7: memref<8x128xf32, #tpu.memory_space<vmem>>) attributes {dimension_semantics = [#tpu.dimension_semantics<parallel>], iteration_bounds = array<i64: 1>, scalar_prefetch = 0 : i64, scratch_operands = 0 : i64, tpu.core_type = #tpu.core_type<tc>, window_params = [{transform_indices = @transform_0, window_bounds = array<i64: 2>}, {transform_indices = @transform_1, window_bounds = array<i64: 8, 128>}, {pipeline_mode = #tpu.pipeline_mode<synchronous>, transform_indices = @transform_2, window_bounds = array<i64: 128, 128>}, {pipeline_mode = #tpu.pipeline_mode<synchronous>, transform_indices = @transform_3, window_bounds = array<i64: 1, 128>}, {pipeline_mode = #tpu.pipeline_mode<synchronous>, transform_indices = @transform_4, window_bounds = array<i64: 128, 128>}, {pipeline_mode = #tpu.pipeline_mode<synchronous>, transform_indices = @transform_5, window_bounds = array<i64: 1, 128>}, {transform_indices = @transform_6, window_bounds = array<i64: 8, 128>}]} {
    %c0 = arith.constant 0 : index
    %c0_0 = arith.constant 0 : index
    %0 = vector.load %arg2[%c0, %c0_0] : memref<8x128xf32, #tpu.memory_space<vmem>>, vector<8x128xf32>
    %c0_1 = arith.constant 0 : index
    %c0_2 = arith.constant 0 : index
    %1 = vector.load %arg3[%c0_1, %c0_2] : memref<128x128xf32, #tpu.memory_space<vmem>>, vector<128x128xf32>
    %cst = arith.constant dense<0.000000e+00> : vector<8x128xf32>
    %2 = tpu.matmul %0, %1, %cst {dimension_numbers = #tpu.dot_dimension_numbers<[1], [0], [0], [1], [0, 0, 1, 1], [], []>} : vector<8x128xf32>, vector<128x128xf32>, vector<8x128xf32> -> vector<8x128xf32>
    %c0_3 = arith.constant 0 : index
    %c0_4 = arith.constant 0 : index
    %3 = vector.load %arg4[%c0_3, %c0_4] : memref<1x128xf32, #tpu.memory_space<vmem>>, vector<1x128xf32>
    %4 = vector.broadcast %3 : vector<1x128xf32> to vector<8x128xf32>
    %5 = arith.addf %2, %4 : vector<8x128xf32>
    %c0_5 = arith.constant 0 : index
    %6 = memref.load %arg1[%c0_5] : memref<2xf32, #tpu.memory_space<smem>>
    %cst_6 = arith.constant 0.000000e+00 : f32
    %7 = vector.broadcast %cst_6 : f32 to vector<8x128xf32>
    %8 = arith.cmpf oge, %5, %7 : vector<8x128xf32>
    %9 = vector.broadcast %6 : f32 to vector<8x128xf32>
    %10 = arith.mulf %9, %5 : vector<8x128xf32>
    %11 = arith.select %8, %5, %10 : vector<8x128xi1>, vector<8x128xf32>
    %c0_7 = arith.constant 0 : index
    %c0_8 = arith.constant 0 : index
    %12 = vector.load %arg5[%c0_7, %c0_8] : memref<128x128xf32, #tpu.memory_space<vmem>>, vector<128x128xf32>
    %cst_9 = arith.constant dense<0.000000e+00> : vector<8x128xf32>
    %13 = tpu.matmul %11, %12, %cst_9 {dimension_numbers = #tpu.dot_dimension_numbers<[1], [0], [0], [1], [0, 0, 1, 1], [], []>} : vector<8x128xf32>, vector<128x128xf32>, vector<8x128xf32> -> vector<8x128xf32>
    %c0_10 = arith.constant 0 : index
    %c0_11 = arith.constant 0 : index
    %14 = vector.load %arg6[%c0_10, %c0_11] : memref<1x128xf32, #tpu.memory_space<vmem>>, vector<1x128xf32>
    %15 = vector.broadcast %14 : vector<1x128xf32> to vector<8x128xf32>
    %16 = arith.addf %13, %15 : vector<8x128xf32>
    %17 = arith.addf %16, %0 : vector<8x128xf32>
    %c1 = arith.constant 1 : index
    %18 = memref.load %arg1[%c1] : memref<2xf32, #tpu.memory_space<smem>>
    %cst_12 = arith.constant 0.000000e+00 : f32
    %19 = vector.broadcast %cst_12 : f32 to vector<8x128xf32>
    %20 = arith.cmpf oge, %17, %19 : vector<8x128xf32>
    %21 = vector.broadcast %18 : f32 to vector<8x128xf32>
    %22 = arith.mulf %21, %17 : vector<8x128xf32>
    %23 = arith.select %20, %17, %22 : vector<8x128xi1>, vector<8x128xf32>
    %c0_13 = arith.constant 0 : index
    %c0_14 = arith.constant 0 : index
    %24 = vector.load %arg7[%c0_13, %c0_14] : memref<8x128xf32, #tpu.memory_space<vmem>>, vector<8x128xf32>
    tpu.vector_store %arg7[%c0_13, %c0_14], %23 {strides = array<i32>} : memref<8x128xf32, #tpu.memory_space<vmem>>, vector<8x128xf32>,
    return
  }
  func.func @transform_0(%arg0: i32) -> i32 {
    %c0_i32 = arith.constant 0 : i32
    %c0_i32_0 = arith.constant 0 : i32
    return %c0_i32 : i32
  }
  func.func @transform_1(%arg0: i32) -> (i32, i32) {
    %c0_i32 = arith.constant 0 : i32
    %c0_i32_0 = arith.constant 0 : i32
    return %arg0, %c0_i32 : i32, i32
  }
  func.func @transform_2(%arg0: i32) -> (i32, i32) {
    %c0_i32 = arith.constant 0 : i32
    %c0_i32_0 = arith.constant 0 : i32
    %c0_i32_1 = arith.constant 0 : i32
    return %c0_i32, %c0_i32_0 : i32, i32
  }
  func.func @transform_3(%arg0: i32) -> (i32, i32) {
    %c0_i32 = arith.constant 0 : i32
    %c0_i32_0 = arith.constant 0 : i32
    %c0_i32_1 = arith.constant 0 : i32
    return %c0_i32, %c0_i32_0 : i32, i32
  }
  func.func @transform_4(%arg0: i32) -> (i32, i32) {
    %c0_i32 = arith.constant 0 : i32
    %c0_i32_0 = arith.constant 0 : i32
    %c0_i32_1 = arith.constant 0 : i32
    return %c0_i32, %c0_i32_0 : i32, i32
  }
  func.func @transform_5(%arg0: i32) -> (i32, i32) {
    %c0_i32 = arith.constant 0 : i32
    %c0_i32_0 = arith.constant 0 : i32
    %c0_i32_1 = arith.constant 0 : i32
    return %c0_i32, %c0_i32_0 : i32, i32
  }
  func.func @transform_6(%arg0: i32) -> (i32, i32) {
    %c0_i32 = arith.constant 0 : i32
    %c0_i32_0 = arith.constant 0 : i32
    return %arg0, %c0_i32 : i32, i32
  }
}

</mosaic_0001>

<llo_original>
// kernel: tpu_custom_call.1
$region0: #{tpu_custom_call.1}
  #allocation0 [shape = 'u32[]', space=smem, size = 0x4, offset = 0x4, fixed_abs, tag = 'smem constant byte address 0x4 - core index']
  #allocation1 [shape = 'u32[144,128]{1,0:T(1,128)}', space=vmem, size = 0x12000, scoped, tag = 'internal scratch']
  %s0 = inlined_call_operand.hbm [shape: f32[2], index: 0, kind: input, shape index: {}]
  %s1 = inlined_call_operand.hbm [shape: f32[8,128], index: 1, kind: input, shape index: {}]
  %s2 = inlined_call_operand.hbm [shape: f32[128,128], index: 2, kind: input, shape index: {}]
  %s3 = inlined_call_operand.vmem [shape: f32[1,128], index: 3, kind: input, shape index: {}]
  %s4 = inlined_call_operand.hbm [shape: f32[128,128], index: 4, kind: input, shape index: {}]
  %s5 = inlined_call_operand.vmem [shape: f32[1,128], index: 5, kind: input, shape index: {}]
  %s6 = inlined_call_operand.hbm [shape: f32[8,128], index: 6, kind: output, shape index: {}]
  %s7 = sld [smem:[#allocation0]]
  $region50: #{tpu_custom_call.1} parent=0
    _
  %s9 = ssub.s32 1, %s7
  %s10 = scalar_select 0, %s9, %s7
  $region1: #{tpu_custom_call.1} parent=0
    #allocation2 [shape = 'u8[512]{0}', space=smem, size = 0x200, scoped, tag = 'input window, operand 0, single buffered']
    #allocation3 [shape = 's32[1]{0}', space=sflag, size = 0x4, scoped, tag = 'scoped memory for tpu_custom_call.1']
    #allocation4 [shape = 's32[1]{0}', space=sflag, size = 0x4, scoped, tag = 'scoped memory for tpu_custom_call.1']
    #allocation5 [shape = 's32[1]{0}', space=sflag, size = 0x4, scoped, tag = 'scoped memory for tpu_custom_call.1']
    #allocation6 [shape = 'u8[4096]{0}', space=vmem, size = 0x1000, scoped, tag = 'input window, operand 1, single buffered']
    #allocation7 [shape = 'u8[65536]{0}', space=vmem, size = 0x10000, scoped, tag = 'input window, operand 2, single buffered']
    #allocation8 [shape = 's32[1]{0}', space=sflag, size = 0x4, scoped, tag = 'scoped memory for tpu_custom_call.1']
    #allocation9 [shape = 'u8[65536]{0}', space=vmem, size = 0x10000, scoped, tag = 'input window, operand 4, single buffered']
    #allocation10 [shape = 'u8[4096]{0}', space=vmem, size = 0x1000, scoped, tag = 'output window, operand 0, single buffered']
    %11 = vsyncpa [#allocation5], 0
    %12 = vsyncpa [#allocation3], 0
    %13 = vsyncpa [#allocation8], 0
    %14 = vsyncpa [#allocation4], 0
    // Predicated region
    $region2: #{tpu_custom_call.1} parent=1 // pred_check
      _
    $region3: #{tpu_custom_call.1} parent=1 // pred_check_branch
      %16 = sbr.rel (0) target = $region5
    $region4: #{tpu_custom_call.1} parent=1 // pred_region
      %s18 = ssub.s32 16, 16
      %19 = vsyncadd [#allocation5], %s18
      %22 = dma.hbm_to_smem %s0, 16, [#allocation2], [#allocation5]
    $region5: #{tpu_custom_call.1} parent=1 // pred_fallthru
      _
    // Predicated region
    $region6: #{tpu_custom_call.1} parent=1 // pred_check
      _
    $region7: #{tpu_custom_call.1} parent=1 // pred_check_branch
      %24 = sbr.rel (0) target = $region9
    $region8: #{tpu_custom_call.1} parent=1 // pred_region
      %s26 = ssub.s32 128, 128
      %27 = vsyncadd [#allocation3], %s26
      %s29 = sshll.u32 [#allocation6], 4
      %s30 = int_to_ptr.vmem [resolvable:$true] %s29
      %32 = dma.hbm_to_vmem [thread:$0]  %s1, 128, %s30, [#allocation3]
    $region9: #{tpu_custom_call.1} parent=1 // pred_fallthru
      _
    // Predicated region
    $region10: #{tpu_custom_call.1} parent=1 // pred_check
      _
    $region11: #{tpu_custom_call.1} parent=1 // pred_check_branch
      %34 = sbr.rel (0) target = $region13
    $region12: #{tpu_custom_call.1} parent=1 // pred_region
      %s36 = ssub.s32 2048, 2048
      %37 = vsyncadd [#allocation8], %s36
      %s38 = sshll.u32 [#allocation7], 4
      %s39 = int_to_ptr.vmem [resolvable:$true] %s38
      %44 = dma.hbm_to_vmem [thread:$0]  %s2, 2048, %s39, [#allocation8], 128, 128, 8
    $region13: #{tpu_custom_call.1} parent=1 // pred_fallthru
      _
    // Predicated region
    $region14: #{tpu_custom_call.1} parent=1 // pred_check
      _
    $region15: #{tpu_custom_call.1} parent=1 // pred_check_branch
      %46 = sbr.rel (0) target = $region17
    $region16: #{tpu_custom_call.1} parent=1 // pred_region
      _
    $region17: #{tpu_custom_call.1} parent=1 // pred_fallthru
      _
    // Predicated region
    $region18: #{tpu_custom_call.1} parent=1 // pred_check
      _
    $region19: #{tpu_custom_call.1} parent=1 // pred_check_branch
      %48 = sbr.rel (0) target = $region21
    $region20: #{tpu_custom_call.1} parent=1 // pred_region
      %s50 = ssub.s32 2048, 2048
      %51 = vsyncadd [#allocation8], %s50
      %s52 = sshll.u32 [#allocation9], 4
      %s53 = int_to_ptr.vmem [resolvable:$true] %s52
      %58 = dma.hbm_to_vmem [thread:$0]  %s4, 2048, %s53, [#allocation8], 128, 128, 8
    $region21: #{tpu_custom_call.1} parent=1 // pred_fallthru
      _
    // Predicated region
    $region22: #{tpu_custom_call.1} parent=1 // pred_check
      _
    $region23: #{tpu_custom_call.1} parent=1 // pred_check_branch
      %60 = sbr.rel (0) target = $region25
    $region24: #{tpu_custom_call.1} parent=1 // pred_region
      _
    $region25: #{tpu_custom_call.1} parent=1 // pred_fallthru
      _
    // Predicated region
    $region26: #{tpu_custom_call.1} parent=1 // pred_check
      _
    $region27: #{tpu_custom_call.1} parent=1 // pred_check_branch
      %62 = sbr.rel (0) target = $region29
    $region28: #{tpu_custom_call.1} parent=1 // pred_region
      %63 = dma.done [#allocation5], 16
    $region29: #{tpu_custom_call.1} parent=1 // pred_fallthru
      _
    // Predicated region
    $region30: #{tpu_custom_call.1} parent=1 // pred_check
      _
    $region31: #{tpu_custom_call.1} parent=1 // pred_check_branch
      %65 = sbr.rel (0) target = $region33
    $region32: #{tpu_custom_call.1} parent=1 // pred_region
      %66 = dma.done [#allocation3], 128
    $region33: #{tpu_custom_call.1} parent=1 // pred_fallthru
      _
    // Predicated region
    $region34: #{tpu_custom_call.1} parent=1 // pred_check
      _
    $region35: #{tpu_custom_call.1} parent=1 // pred_check_branch
      %68 = sbr.rel (0) target = $region37
    $region36: #{tpu_custom_call.1} parent=1 // pred_region
      %69 = dma.done [#allocation8], 2048
    $region37: #{tpu_custom_call.1} parent=1 // pred_fallthru
      _
    // Predicated region
    $region38: #{tpu_custom_call.1} parent=1 // pred_check
      _
    $region39: #{tpu_custom_call.1} parent=1 // pred_check_branch
      %71 = sbr.rel (0) target = $region41
    $region40: #{tpu_custom_call.1} parent=1 // pred_region
      %72 = dma.done [#allocation8], 2048
    $region41: #{tpu_custom_call.1} parent=1 // pred_fallthru
      _
    %73 = sfence
    %v74 = vld [vmem:[#allocation6] sm:$0xff]
    %v75 = vld [vmem:[#allocation7] sm:$0xff]
    %v76 = vld [vmem:[#allocation7 + $0x8] sm:$0xff]
    %v77 = vld [vmem:[#allocation7 + $0x10] sm:$0xff]
    %v78 = vld [vmem:[#allocation7 + $0x18] sm:$0xff]
    %v79 = vld [vmem:[#allocation7 + $0x20] sm:$0xff]
    %v80 = vld [vmem:[#allocation7 + $0x28] sm:$0xff]
    %v81 = vld [vmem:[#allocation7 + $0x30] sm:$0xff]
    %v82 = vld [vmem:[#allocation7 + $0x38] sm:$0xff]
    %v83 = vld [vmem:[#allocation7 + $0x40] sm:$0xff]
    %v84 = vld [vmem:[#allocation7 + $0x48] sm:$0xff]
    %v85 = vld [vmem:[#allocation7 + $0x50] sm:$0xff]
    %v86 = vld [vmem:[#allocation7 + $0x58] sm:$0xff]
    %v87 = vld [vmem:[#allocation7 + $0x60] sm:$0xff]
    %v88 = vld [vmem:[#allocation7 + $0x68] sm:$0xff]
    %v89 = vld [vmem:[#allocation7 + $0x70] sm:$0xff]
    %v90 = vld [vmem:[#allocation7 + $0x78] sm:$0xff]
    %v91 = vld [vmem:[%s3] sm:$0x1]
    %v93 = vlaneseq
    %v94 = vshrl.u32 %v93, 7
    %v95 = vsub.s32 0, %v94
    %v96 = vrot.slane %v91, %v95
    %98 = vmatprep.subr.mxu0 0.0
    %99 = vmatpush1.msra.mxu0 %v75
    %100 = vmatprep.subr.mxu0 0.0
    %101 = vmatpush1.msra.mxu0 %v76
    %102 = vmatprep.subr.mxu0 0.0
    %103 = vmatpush1.msra.mxu0 %v77
    %104 = vmatprep.subr.mxu0 0.0
    %105 = vmatpush1.msra.mxu0 %v78
    %106 = vmatprep.subr.mxu0 0.0
    %107 = vmatpush1.msra.mxu0 %v79
    %108 = vmatprep.subr.mxu0 0.0
    %109 = vmatpush1.msra.mxu0 %v80
    %110 = vmatprep.subr.mxu0 0.0
    %111 = vmatpush1.msra.mxu0 %v81
    %112 = vmatprep.subr.mxu0 0.0
    %113 = vmatpush1.msra.mxu0 %v82
    %114 = vmatprep.subr.mxu0 0.0
    %115 = vmatpush1.msra.mxu0 %v83
    %116 = vmatprep.subr.mxu0 0.0
    %117 = vmatpush1.msra.mxu0 %v84
    %118 = vmatprep.subr.mxu0 0.0
    %119 = vmatpush1.msra.mxu0 %v85
    %120 = vmatprep.subr.mxu0 0.0
    %121 = vmatpush1.msra.mxu0 %v86
    %122 = vmatprep.subr.mxu0 0.0
    %123 = vmatpush1.msra.mxu0 %v87
    %124 = vmatprep.subr.mxu0 0.0
    %125 = vmatpush1.msra.mxu0 %v88
    %126 = vmatprep.subr.mxu0 0.0
    %127 = vmatpush1.msra.mxu0 %v89
    %128 = vmatprep.subr.mxu0 0.0
    %129 = vmatpush1.msra.mxu0 %v90
    %130 = vmatprep.subr.mxu0 0.0
    %131 = vmatpush1.msra.mxu0 0.0
    %132 = vmatprep.subr.mxu0 0.0
    %133 = vmatpush1.msra.mxu0 0.0
    %134 = vmatprep.subr.mxu0 0.0
    %135 = vmatpush1.msra.mxu0 0.0
    %136 = vmatprep.subr.mxu0 0.0
    %137 = vmatpush1.msra.mxu0 0.0
    %138 = vmatprep.subr.mxu0 0.0
    %139 = vmatpush1.msra.mxu0 0.0
    %140 = vmatprep.subr.mxu0 0.0
    %141 = vmatpush1.msra.mxu0 0.0
    %142 = vmatprep.subr.mxu0 0.0
    %143 = vmatpush1.msra.mxu0 0.0
    %144 = vmatprep.subr.mxu0 0.0
    %145 = vmatpush1.msra.mxu0 0.0
    %146 = vmatprep.subr.mxu0 0.0
    %147 = vmatpush1.msra.mxu0 0.0
    %148 = vmatprep.subr.mxu0 0.0
    %149 = vmatpush1.msra.mxu0 0.0
    %150 = vmatprep.subr.mxu0 0.0
    %151 = vmatpush1.msra.mxu0 0.0
    %152 = vmatprep.subr.mxu0 0.0
    %153 = vmatpush1.msra.mxu0 0.0
    %154 = vmatprep.subr.mxu0 0.0
    %155 = vmatpush1.msra.mxu0 0.0
    %156 = vmatprep.subr.mxu0 0.0
    %157 = vmatpush1.msra.mxu0 0.0
    %158 = vmatprep.subr.mxu0 0.0
    %159 = vmatpush1.msra.mxu0 0.0
    %160 = vmatprep.subr.mxu0 0.0
    %161 = vmatpush1.msra.mxu0 0.0
    %162 = vmatprep.mubr.f32.mxu0 0.0
    %163 = vmatmul.mubr.f32.gmra.mrb[0].mxu0 %v74
    %v164 = vpop.f32.mrb[0].mxu0
    %v165 = vadd.f32 %v96, %v164
    %v166 = vpop.f32.mrb[0].mxu0
    %167 = vdwg.mxu0
    %s168 = sld [smem:[#allocation2]]
    %vm169 = vcmp.ge.f32.partialorder %v165, 0.0
    %v170 = vstv %s168
    %v171 = vmul.f32 %v170, %v165
    %v172 = vsel %vm169, %v165, %v171
    %v173 = vld [vmem:[#allocation9] sm:$0xff]
    %v174 = vld [vmem:[#allocation9 + $0x8] sm:$0xff]
    %v175 = vld [vmem:[#allocation9 + $0x10] sm:$0xff]
    %v176 = vld [vmem:[#allocation9 + $0x18] sm:$0xff]
    %v177 = vld [vmem:[#allocation9 + $0x20] sm:$0xff]
    %v178 = vld [vmem:[#allocation9 + $0x28] sm:$0xff]
    %v179 = vld [vmem:[#allocation9 + $0x30] sm:$0xff]
    %v180 = vld [vmem:[#allocation9 + $0x38] sm:$0xff]
    %v181 = vld [vmem:[#allocation9 + $0x40] sm:$0xff]
    %v182 = vld [vmem:[#allocation9 + $0x48] sm:$0xff]
    %v183 = vld [vmem:[#allocation9 + $0x50] sm:$0xff]
    %v184 = vld [vmem:[#allocation9 + $0x58] sm:$0xff]
    %v185 = vld [vmem:[#allocation9 + $0x60] sm:$0xff]
    %v186 = vld [vmem:[#allocation9 + $0x68] sm:$0xff]
    %v187 = vld [vmem:[#allocation9 + $0x70] sm:$0xff]
    %v188 = vld [vmem:[#allocation9 + $0x78] sm:$0xff]
    %v189 = vld [vmem:[%s5] sm:$0x1]
    %v191 = vlaneseq
    %v192 = vshrl.u32 %v191, 7
    %v193 = vsub.s32 0, %v192
    %v194 = vrot.slane %v189, %v193
    %196 = vmatprep.subr.mxu0 0.0
    %197 = vmatpush1.msra.mxu0 %v173
    %198 = vmatprep.subr.mxu0 0.0
    %199 = vmatpush1.msra.mxu0 %v174
    %200 = vmatprep.subr.mxu0 0.0
    %201 = vmatpush1.msra.mxu0 %v175
    %202 = vmatprep.subr.mxu0 0.0
    %203 = vmatpush1.msra.mxu0 %v176
    %204 = vmatprep.subr.mxu0 0.0
    %205 = vmatpush1.msra.mxu0 %v177
    %206 = vmatprep.subr.mxu0 0.0
    %207 = vmatpush1.msra.mxu0 %v178
    %208 = vmatprep.subr.mxu0 0.0
    %209 = vmatpush1.msra.mxu0 %v179
    %210 = vmatprep.subr.mxu0 0.0
    %211 = vmatpush1.msra.mxu0 %v180
    %212 = vmatprep.subr.mxu0 0.0
    %213 = vmatpush1.msra.mxu0 %v181
    %214 = vmatprep.subr.mxu0 0.0
    %215 = vmatpush1.msra.mxu0 %v182
    %216 = vmatprep.subr.mxu0 0.0
    %217 = vmatpush1.msra.mxu0 %v183
    %218 = vmatprep.subr.mxu0 0.0
    %219 = vmatpush1.msra.mxu0 %v184
    %220 = vmatprep.subr.mxu0 0.0
    %221 = vmatpush1.msra.mxu0 %v185
    %222 = vmatprep.subr.mxu0 0.0
    %223 = vmatpush1.msra.mxu0 %v186
    %224 = vmatprep.subr.mxu0 0.0
    %225 = vmatpush1.msra.mxu0 %v187
    %226 = vmatprep.subr.mxu0 0.0
    %227 = vmatpush1.msra.mxu0 %v188
    %228 = vmatprep.subr.mxu0 0.0
    %229 = vmatpush1.msra.mxu0 0.0
    %230 = vmatprep.subr.mxu0 0.0
    %231 = vmatpush1.msra.mxu0 0.0
    %232 = vmatprep.subr.mxu0 0.0
    %233 = vmatpush1.msra.mxu0 0.0
    %234 = vmatprep.subr.mxu0 0.0
    %235 = vmatpush1.msra.mxu0 0.0
    %236 = vmatprep.subr.mxu0 0.0
    %237 = vmatpush1.msra.mxu0 0.0
    %238 = vmatprep.subr.mxu0 0.0
    %239 = vmatpush1.msra.mxu0 0.0
    %240 = vmatprep.subr.mxu0 0.0
    %241 = vmatpush1.msra.mxu0 0.0
    %242 = vmatprep.subr.mxu0 0.0
    %243 = vmatpush1.msra.mxu0 0.0
    %244 = vmatprep.subr.mxu0 0.0
    %245 = vmatpush1.msra.mxu0 0.0
    %246 = vmatprep.subr.mxu0 0.0
    %247 = vmatpush1.msra.mxu0 0.0
    %248 = vmatprep.subr.mxu0 0.0
    %249 = vmatpush1.msra.mxu0 0.0
    %250 = vmatprep.subr.mxu0 0.0
    %251 = vmatpush1.msra.mxu0 0.0
    %252 = vmatprep.subr.mxu0 0.0
    %253 = vmatpush1.msra.mxu0 0.0
    %254 = vmatprep.subr.mxu0 0.0
    %255 = vmatpush1.msra.mxu0 0.0
    %256 = vmatprep.subr.mxu0 0.0
    %257 = vmatpush1.msra.mxu0 0.0
    %258 = vmatprep.subr.mxu0 0.0
    %259 = vmatpush1.msra.mxu0 0.0
    %260 = vmatprep.mubr.f32.mxu0 0.0
    %261 = vmatmul.mubr.f32.gmra.mrb[0].mxu0 %v172
    %v262 = vpop.f32.mrb[0].mxu0
    %v263 = vadd.f32 %v194, %v262
    %v264 = vpop.f32.mrb[0].mxu0
    %265 = vdwg.mxu0
    %v266 = vadd.f32 %v263, %v74
    %s267 = sld [smem:[#allocation2 + $0x1]]
    %vm268 = vcmp.ge.f32.partialorder %v266, 0.0
    %v269 = vstv %s267
    %v270 = vmul.f32 %v269, %v266
    %v271 = vsel %vm268, %v266, %v270
    %272 = vst [vmem:[#allocation10] sm:$0xff] %v271
    // Predicated region
    $region42: #{tpu_custom_call.1} parent=1 // pred_check
      _
    $region43: #{tpu_custom_call.1} parent=1 // pred_check_branch
      %274 = sbr.rel (0) target = $region45
    $region44: #{tpu_custom_call.1} parent=1 // pred_region
      %s276 = ssub.s32 128, 128
      %277 = vsyncadd [#allocation4], %s276
      %s279 = sshll.u32 [#allocation10], 4
      %s280 = int_to_ptr.vmem [resolvable:$true] %s279
      %282 = dma.vmem_to_hbm [thread:$0]  %s280, 128, %s6, [#allocation4]
    $region45: #{tpu_custom_call.1} parent=1 // pred_fallthru
      _
    // Predicated region
    $region46: #{tpu_custom_call.1} parent=1 // pred_check
      _
    $region47: #{tpu_custom_call.1} parent=1 // pred_check_branch
      %284 = sbr.rel (0) target = $region49
    $region48: #{tpu_custom_call.1} parent=1 // pred_region
      %285 = dma.done [#allocation4], 128
    $region49: #{tpu_custom_call.1} parent=1 // pred_fallthru
      _
    %286 = vsyncpa [#allocation3], 1
    %287 = vsyncpa [#allocation8], 1
    %288 = vsyncpa [#allocation4], 1
    %289 = vsyncpa [#allocation5], 1

</llo_original>
